<compile_context>
chip_gen: v5e
topology: v5e:2x2
jax: 0.10.0
libtpu: 0.0.40
codegen_flags: <defaults>
</compile_context>

<pallas_src>
import math
from functools import partial

import jax
import jax.numpy as jnp
from jax import lax
from jax.experimental import pallas as pl
from jax.experimental.pallas import tpu as pltpu

NUM_GROUPS = 32
GN_EPS = 1e-5
VMEM_LIMIT = 48 * 1024 * 1024  # fits every generation (v7x has 64 MiB physical)


# ---------------------------------------------------------------------------
# Pass 1: GroupNorm statistics -> per-channel scale / shift
# ---------------------------------------------------------------------------
def _gn_stats_kernel(x_ref, gamma_ref, beta_ref, gsel_ref,
                     scale_ref, shift_ref,
                     sum_scr, sq_scr, *, inv_count):
    si = pl.program_id(1)

    @pl.when(si == 0)
    def _():
        sum_scr[...] = jnp.zeros_like(sum_scr)
        sq_scr[...] = jnp.zeros_like(sq_scr)

    x = x_ref[0]                                              # (TS, C) f32
    sum_scr[...] += jnp.sum(x, axis=0, keepdims=True)         # (1, C)
    sq_scr[...] += jnp.sum(x * x, axis=0, keepdims=True)      # (1, C)

    @pl.when(si == pl.num_programs(1) - 1)
    def _():
        # (1, C) @ (C, G) -> (1, G): per-group sums (skinny matmul, no dense C x C).
        gsum = jnp.dot(sum_scr[...], gsel_ref[...], preferred_element_type=jnp.float32)
        gsq = jnp.dot(sq_scr[...], gsel_ref[...], preferred_element_type=jnp.float32)
        mean_g = gsum * inv_count
        # clamp: E[x^2] - E[x]^2 can go slightly negative from cancellation
        var_g = jnp.maximum(gsq * inv_count - mean_g * mean_g, 0.0)
        rstd_g = lax.rsqrt(var_g + GN_EPS)
        # broadcast per-group values back to per-channel: (1, G) x (C, G)^T -> (1, C)
        dims = (((1,), (1,)), ((), ()))
        mean_c = lax.dot_general(mean_g, gsel_ref[...], dims,
                                 preferred_element_type=jnp.float32)
        rstd_c = lax.dot_general(rstd_g, gsel_ref[...], dims,
                                 preferred_element_type=jnp.float32)
        a = gamma_ref[...] * rstd_c
        scale_ref[0] = a
        shift_ref[0] = beta_ref[...] - a * mean_c


# ---------------------------------------------------------------------------
# Pass 2: K / V projection (bf16 operands, f32 accumulation, bf16 storage)
# ---------------------------------------------------------------------------
def _kv_proj_kernel(x_ref, scale_ref, shift_ref, wk_ref, bk_ref, wv_ref, bv_ref,
                    k_out_ref, v_out_ref):
    xn = (x_ref[0] * scale_ref[0] + shift_ref[0]).astype(jnp.bfloat16)   # (TS, C)
    k = jnp.dot(xn, wk_ref[...], preferred_element_type=jnp.float32) + bk_ref[...]
    v = jnp.dot(xn, wv_ref[...], preferred_element_type=jnp.float32) + bv_ref[...]
    k_out_ref[0] = k.astype(jnp.bfloat16)
    v_out_ref[0] = v.astype(jnp.bfloat16)


# ---------------------------------------------------------------------------
# Pass 3: flash attention (online softmax) + out-projection + residual
# ---------------------------------------------------------------------------
def _flash_attn_kernel(x_ref, scale_ref, shift_ref, wq_ref, bq_ref,
                       k_ref, v_ref, wout_ref, bout_ref, o_ref,
                       q_scr, m_scr, l_scr, acc_scr, *, sm_scale):
    ki = pl.program_id(2)

    @pl.when(ki == 0)
    def _():
        # Q for this tile, computed once; softmax scale folded in before bf16 cast.
        xn = (x_ref[0] * scale_ref[0] + shift_ref[0]).astype(jnp.bfloat16)
        q = jnp.dot(xn, wq_ref[...], preferred_element_type=jnp.float32) + bq_ref[...]
        q_scr[...] = (q * sm_scale).astype(jnp.bfloat16)
        m_scr[...] = jnp.full_like(m_scr, -jnp.inf)
        l_scr[...] = jnp.zeros_like(l_scr)
        acc_scr[...] = jnp.zeros_like(acc_scr)

    # Q K^T without forming K^T: contract the last dim of both operands.
    s = lax.dot_general(q_scr[...], k_ref[0],
                        dimension_numbers=(((1,), (1,)), ((), ())),
                        preferred_element_type=jnp.float32)              # (TQ, TK) f32

    m_prev = m_scr[...]
    m_new = jnp.maximum(m_prev, jnp.max(s, axis=-1, keepdims=True))
    alpha = jnp.exp(m_prev - m_new)
    p = jnp.exp(s - m_new)
    l_scr[...] = alpha * l_scr[...] + jnp.sum(p, axis=-1, keepdims=True)
    acc_scr[...] = alpha * acc_scr[...] + jnp.dot(
        p.astype(jnp.bfloat16), v_ref[0], preferred_element_type=jnp.float32)
    m_scr[...] = m_new

    @pl.when(ki == pl.num_programs(2) - 1)
    def _():
        out = acc_scr[...] * pl.reciprocal(l_scr[...], approx=True)
        proj = jnp.dot(out.astype(jnp.bfloat16), wout_ref[...],
                       preferred_element_type=jnp.float32) + bout_ref[...]
        # residual comes straight from the Q tile of x already resident in VMEM
        o_ref[0] = (proj + x_ref[0]).astype(o_ref.dtype)


# ---------------------------------------------------------------------------
# Wrapper
# ---------------------------------------------------------------------------
def _pick_tile(total, target):
    """Largest multiple-of-8 divisor of `total` that is <= target (fallback: total)."""
    best = None
    for d in range(8, min(target, total) + 1, 8):
        if total % d == 0:
            best = d
    return best if best is not None else total


def vae_attention_block(x_nchw, params, *, tq=256, tk=512, ts=512):
    n, c, h, w = x_nchw.shape
    hw = h * w
    assert c % NUM_GROUPS == 0, "GroupNorm(32, C) requires C % 32 == 0"
    gs = c // NUM_GROUPS
    f32, bf16 = jnp.float32, jnp.bfloat16

    # NCHW -> (N, HW, C), matching x.view(n, c, h*w).transpose(1, 2)
    x_seq = jnp.transpose(x_nchw.reshape(n, c, hw), (0, 2, 1)).astype(f32)

    gamma = params["gn_gamma"].reshape(1, c).astype(f32)
    beta = params["gn_beta"].reshape(1, c).astype(f32)
    wq = params["wq"].astype(bf16)
    wk = params["wk"].astype(bf16)
    wv = params["wv"].astype(bf16)
    wout = params["wout"].astype(bf16)
    bq = params["bq"].reshape(1, c).astype(f32)
    bk = params["bk"].reshape(1, c).astype(f32)
    bv = params["bv"].reshape(1, c).astype(f32)
    bout = params["bout"].reshape(1, c).astype(f32)

    # Group-selection matrix: gsel[ch, g] = 1.0 iff channel ch belongs to group g.
    gid = jnp.arange(c) // gs
    gsel = (gid[:, None] == jnp.arange(NUM_GROUPS)[None, :]).astype(f32)

    TS = _pick_tile(hw, ts)
    TQ = _pick_tile(hw, tq)
    TK = _pick_tile(hw, tk)
    n_s, n_q, n_k = hw // TS, hw // TQ, hw // TK

    def cparams(sem):
        return pltpu.CompilerParams(dimension_semantics=sem,
                                    vmem_limit_bytes=VMEM_LIMIT)

    # ---------------- Pass 1: GroupNorm stats ----------------
    scale, shift = pl.pallas_call(
        partial(_gn_stats_kernel, inv_count=1.0 / float(gs * hw)),
        out_shape=(jax.ShapeDtypeStruct((n, 1, c), f32),
                   jax.ShapeDtypeStruct((n, 1, c), f32)),
        grid_spec=pltpu.PrefetchScalarGridSpec(
            num_scalar_prefetch=0,
            grid=(n, n_s),
            in_specs=[
                pl.BlockSpec((1, TS, c), lambda b, s: (b, s, 0)),       # x tile
                pl.BlockSpec((1, c), lambda b, s: (0, 0)),              # gamma
                pl.BlockSpec((1, c), lambda b, s: (0, 0)),              # beta
                pl.BlockSpec((c, NUM_GROUPS), lambda b, s: (0, 0)),     # gsel
            ],
            out_specs=[
                pl.BlockSpec((1, 1, c), lambda b, s: (b, 0, 0)),        # scale
                pl.BlockSpec((1, 1, c), lambda b, s: (b, 0, 0)),        # shift
            ],
            scratch_shapes=[pltpu.VMEM((1, c), f32), pltpu.VMEM((1, c), f32)],
        ),
        compiler_params=cparams(("parallel", "arbitrary")),
    )(x_seq, gamma, beta, gsel)

    # ---------------- Pass 2: K / V projection ----------------
    k_seq, v_seq = pl.pallas_call(
        _kv_proj_kernel,
        out_shape=(jax.ShapeDtypeStruct((n, hw, c), bf16),
                   jax.ShapeDtypeStruct((n, hw, c), bf16)),
        grid_spec=pltpu.PrefetchScalarGridSpec(
            num_scalar_prefetch=0,
            grid=(n, n_s),
            in_specs=[
                pl.BlockSpec((1, TS, c), lambda b, s: (b, s, 0)),       # x tile
                pl.BlockSpec((1, 1, c), lambda b, s: (b, 0, 0)),        # scale
                pl.BlockSpec((1, 1, c), lambda b, s: (b, 0, 0)),        # shift
                pl.BlockSpec((c, c), lambda b, s: (0, 0)),              # Wk
                pl.BlockSpec((1, c), lambda b, s: (0, 0)),              # bk
                pl.BlockSpec((c, c), lambda b, s: (0, 0)),              # Wv
                pl.BlockSpec((1, c), lambda b, s: (0, 0)),              # bv
            ],
            out_specs=[
                pl.BlockSpec((1, TS, c), lambda b, s: (b, s, 0)),       # K (bf16)
                pl.BlockSpec((1, TS, c), lambda b, s: (b, s, 0)),       # V (bf16)
            ],
        ),
        compiler_params=cparams(("parallel", "parallel")),
    )(x_seq, scale, shift, wk, bk, wv, bv)

    # ---------------- Pass 3: flash attention + out-proj + residual ----------------
    out_seq = pl.pallas_call(
        partial(_flash_attn_kernel, sm_scale=1.0 / math.sqrt(c)),
        out_shape=jax.ShapeDtypeStruct((n, hw, c), f32),
        grid_spec=pltpu.PrefetchScalarGridSpec(
            num_scalar_prefetch=0,
            grid=(n, n_q, n_k),
            in_specs=[
                pl.BlockSpec((1, TQ, c), lambda b, q, k: (b, q, 0)),    # x (Q tile + residual)
                pl.BlockSpec((1, 1, c), lambda b, q, k: (b, 0, 0)),     # scale
                pl.BlockSpec((1, 1, c), lambda b, q, k: (b, 0, 0)),     # shift
                pl.BlockSpec((c, c), lambda b, q, k: (0, 0)),           # Wq
                pl.BlockSpec((1, c), lambda b, q, k: (0, 0)),           # bq
                pl.BlockSpec((1, TK, c), lambda b, q, k: (b, k, 0)),    # K tile
                pl.BlockSpec((1, TK, c), lambda b, q, k: (b, k, 0)),    # V tile
                pl.BlockSpec((c, c), lambda b, q, k: (0, 0)),           # Wout
                pl.BlockSpec((1, c), lambda b, q, k: (0, 0)),           # bout
            ],
            out_specs=pl.BlockSpec((1, TQ, c), lambda b, q, k: (b, q, 0)),
            scratch_shapes=[
                pltpu.VMEM((TQ, c), bf16),   # pre-scaled Q
                pltpu.VMEM((TQ, 1), f32),    # running max
                pltpu.VMEM((TQ, 1), f32),    # running sum
                pltpu.VMEM((TQ, c), f32),    # output accumulator
            ],
        ),
        compiler_params=cparams(("parallel", "parallel", "arbitrary")),
    )(x_seq, scale, shift, wq, bq, k_seq, v_seq, wout, bout)

    # (N, HW, C) -> NCHW  (matches .transpose(1, 2).view(n, c, h, w))
    return jnp.transpose(out_seq, (0, 2, 1)).reshape(n, c, h, w)


# ---------------------------------------------------------------------------
# Pure-JAX f32 reference replicating the PyTorch forward
# ---------------------------------------------------------------------------
def reference_jax(x_nchw, params):
    n, c, h, w = x_nchw.shape
    hw = h * w
    x = x_nchw.astype(jnp.float32)

    xg = x.reshape(n, NUM_GROUPS, (c // NUM_GROUPS) * hw)
    mean = xg.mean(axis=-1, keepdims=True)
    var = xg.var(axis=-1, keepdims=True)
    xn = ((xg - mean) / jnp.sqrt(var + GN_EPS)).reshape(n, c, h, w)
    xn = xn * params["gn_gamma"].reshape(1, c, 1, 1) + params["gn_beta"].reshape(1, c, 1, 1)

    seq = jnp.transpose(xn.reshape(n, c, hw), (0, 2, 1))                 # (N, HW, C)
    q = seq @ params["wq"] + params["bq"]
    k = seq @ params["wk"] + params["bk"]
    v = seq @ params["wv"] + params["bv"]
    scores = jnp.einsum("nqc,nkc->nqk", q, k) / math.sqrt(c)
    attn = jax.nn.softmax(scores, axis=-1)
    out = jnp.einsum("nqk,nkc->nqc", attn, v) @ params["wout"] + params["bout"]
    out = jnp.transpose(out, (0, 2, 1)).reshape(n, c, h, w)
    return out + x


if __name__ == "__main__":
    # Small shapes consistent with the module: C must be divisible by 32.
    N, C, H, W = 2, 64, 16, 16

    key = jax.random.PRNGKey(0)
    keys = jax.random.split(key, 11)
    x = jax.random.normal(keys[0], (N, C, H, W), dtype=jnp.float32)

    params = {
        "gn_gamma": 1.0 + 0.1 * jax.random.normal(keys[1], (C,), dtype=jnp.float32),
        "gn_beta": 0.1 * jax.random.normal(keys[2], (C,), dtype=jnp.float32),
        "wq": jax.random.normal(keys[3], (C, C), dtype=jnp.float32) * 0.05,
        "wk": jax.random.normal(keys[4], (C, C), dtype=jnp.float32) * 0.05,
        "wv": jax.random.normal(keys[5], (C, C), dtype=jnp.float32) * 0.05,
        "wout": jax.random.normal(keys[6], (C, C), dtype=jnp.float32) * 0.05,
        "bq": jax.random.normal(keys[7], (C,), dtype=jnp.float32) * 0.05,
        "bk": jax.random.normal(keys[8], (C,), dtype=jnp.float32) * 0.05,
        "bv": jax.random.normal(keys[9], (C,), dtype=jnp.float32) * 0.05,
        "bout": jax.random.normal(keys[10], (C,), dtype=jnp.float32) * 0.05,
    }

    # tiles chosen so the test exercises multiple Q tiles and multiple K steps
    y = jax.block_until_ready(vae_attention_block(x, params, tq=128, tk=128, ts=128))
    y_ref = jax.block_until_ready(reference_jax(x, params))

    assert y.shape == (N, C, H, W)
    err = float(jnp.max(jnp.abs(y - y_ref)))
    # bf16 MXU operands with f32 accumulation -> small deviation from the f32 reference
    assert err < 2e-2, f"max abs err = {err}"
    print("KERNEL_OK")
</pallas_src>

<mosaic_0001>
module attributes {stable_mosaic.version = 11 : i64} {
  func.func @_gn_stats_kernel(%arg0: i32, %arg1: i32, %arg2: memref<1x128x64xf32, #tpu.memory_space<vmem>>, %arg3: memref<1x64xf32, #tpu.memory_space<vmem>>, %arg4: memref<1x64xf32, #tpu.memory_space<vmem>>, %arg5: memref<64x32xf32, #tpu.memory_space<vmem>>, %arg6: memref<1x1x64xf32, #tpu.memory_space<vmem>>, %arg7: memref<1x1x64xf32, #tpu.memory_space<vmem>>, %arg8: memref<1x64xf32, #tpu.memory_space<vmem>>, %arg9: memref<1x64xf32, #tpu.memory_space<vmem>>) attributes {dimension_semantics = [#tpu.dimension_semantics<parallel>, #tpu.dimension_semantics<arbitrary>], iteration_bounds = array<i64: 2, 2>, scalar_prefetch = 0 : i64, scratch_operands = 2 : i64, tpu.core_type = #tpu.core_type<tc>, window_params = [{transform_indices = @transform_0, window_bounds = array<i64: 1, 128, 64>}, {pipeline_mode = #tpu.pipeline_mode<synchronous>, transform_indices = @transform_1, window_bounds = array<i64: 1, 64>}, {pipeline_mode = #tpu.pipeline_mode<synchronous>, transform_indices = @transform_2, window_bounds = array<i64: 1, 64>}, {pipeline_mode = #tpu.pipeline_mode<synchronous>, transform_indices = @transform_3, window_bounds = array<i64: 64, 32>}, {transform_indices = @transform_4, window_bounds = array<i64: 1, 1, 64>}, {transform_indices = @transform_5, window_bounds = array<i64: 1, 1, 64>}]} {
    %c0_i32 = arith.constant 0 : i32
    %0 = arith.cmpi eq, %arg1, %c0_i32 : i32
    %1 = arith.extui %0 : i1 to i32
    %c0_i32_0 = arith.constant 0 : i32
    %2 = arith.cmpi ne, %1, %c0_i32_0 : i32
    scf.if %2 {
      %cst_13 = arith.constant 0.000000e+00 : f32
      %19 = vector.broadcast %cst_13 : f32 to vector<1x64xf32>
      %c0_14 = arith.constant 0 : index
      %c0_15 = arith.constant 0 : index
      %20 = vector.load %arg8[%c0_14, %c0_15] : memref<1x64xf32, #tpu.memory_space<vmem>>, vector<1x64xf32>
      tpu.vector_store %arg8[%c0_14, %c0_15], %19 {strides = array<i32>} : memref<1x64xf32, #tpu.memory_space<vmem>>, vector<1x64xf32>,
      %cst_16 = arith.constant 0.000000e+00 : f32
      %21 = vector.broadcast %cst_16 : f32 to vector<1x64xf32>
      %c0_17 = arith.constant 0 : index
      %c0_18 = arith.constant 0 : index
      %22 = vector.load %arg9[%c0_17, %c0_18] : memref<1x64xf32, #tpu.memory_space<vmem>>, vector<1x64xf32>
      tpu.vector_store %arg9[%c0_17, %c0_18], %21 {strides = array<i32>} : memref<1x64xf32, #tpu.memory_space<vmem>>, vector<1x64xf32>,
    } else {
    }
    %c0 = arith.constant 0 : index
    %c0_1 = arith.constant 0 : index
    %c0_2 = arith.constant 0 : index
    %3 = vector.load %arg2[%c0, %c0_1, %c0_2] : memref<1x128x64xf32, #tpu.memory_space<vmem>>, vector<1x128x64xf32>
    %4 = vector.shape_cast %3 : vector<1x128x64xf32> to vector<128x64xf32>
    %c0_3 = arith.constant 0 : index
    %c0_4 = arith.constant 0 : index
    %5 = vector.load %arg8[%c0_3, %c0_4] : memref<1x64xf32, #tpu.memory_space<vmem>>, vector<1x64xf32>
    %cst = arith.constant dense<0.000000e+00> : vector<64xf32>
    %6 = vector.multi_reduction <add>, %4, %cst [0] : vector<128x64xf32> to vector<64xf32>
    %7 = vector.shape_cast %6 : vector<64xf32> to vector<1x64xf32>
    %8 = arith.addf %5, %7 : vector<1x64xf32>
    %c0_5 = arith.constant 0 : index
    %c0_6 = arith.constant 0 : index
    %9 = vector.load %arg8[%c0_5, %c0_6] : memref<1x64xf32, #tpu.memory_space<vmem>>, vector<1x64xf32>
    tpu.vector_store %arg8[%c0_5, %c0_6], %8 {strides = array<i32>} : memref<1x64xf32, #tpu.memory_space<vmem>>, vector<1x64xf32>,
    %c0_7 = arith.constant 0 : index
    %c0_8 = arith.constant 0 : index
    %10 = vector.load %arg9[%c0_7, %c0_8] : memref<1x64xf32, #tpu.memory_space<vmem>>, vector<1x64xf32>
    %11 = arith.mulf %4, %4 : vector<128x64xf32>
    %cst_9 = arith.constant dense<0.000000e+00> : vector<64xf32>
    %12 = vector.multi_reduction <add>, %11, %cst_9 [0] : vector<128x64xf32> to vector<64xf32>
    %13 = vector.shape_cast %12 : vector<64xf32> to vector<1x64xf32>
    %14 = arith.addf %10, %13 : vector<1x64xf32>
    %c0_10 = arith.constant 0 : index
    %c0_11 = arith.constant 0 : index
    %15 = vector.load %arg9[%c0_10, %c0_11] : memref<1x64xf32, #tpu.memory_space<vmem>>, vector<1x64xf32>
    tpu.vector_store %arg9[%c0_10, %c0_11], %14 {strides = array<i32>} : memref<1x64xf32, #tpu.memory_space<vmem>>, vector<1x64xf32>,
    %c1_i32 = arith.constant 1 : i32
    %16 = arith.cmpi eq, %arg1, %c1_i32 : i32
    %17 = arith.extui %16 : i1 to i32
    %c0_i32_12 = arith.constant 0 : i32
    %18 = arith.cmpi ne, %17, %c0_i32_12 : i32
    scf.if %18 {
      %c0_13 = arith.constant 0 : index
      %c0_14 = arith.constant 0 : index
      %19 = vector.load %arg8[%c0_13, %c0_14] : memref<1x64xf32, #tpu.memory_space<vmem>>, vector<1x64xf32>
      %c0_15 = arith.constant 0 : index
      %c0_16 = arith.constant 0 : index
      %20 = vector.load %arg5[%c0_15, %c0_16] : memref<64x32xf32, #tpu.memory_space<vmem>>, vector<64x32xf32>
      %cst_17 = arith.constant dense<0.000000e+00> : vector<1x32xf32>
      %21 = tpu.matmul %19, %20, %cst_17 {dimension_numbers = #tpu.dot_dimension_numbers<[1], [0], [0], [1], [0, 0, 1, 1], [], []>} : vector<1x64xf32>, vector<64x32xf32>, vector<1x32xf32> -> vector<1x32xf32>
      %c0_18 = arith.constant 0 : index
      %c0_19 = arith.constant 0 : index
      %22 = vector.load %arg9[%c0_18, %c0_19] : memref<1x64xf32, #tpu.memory_space<vmem>>, vector<1x64xf32>
      %c0_20 = arith.constant 0 : index
      %c0_21 = arith.constant 0 : index
      %23 = vector.load %arg5[%c0_20, %c0_21] : memref<64x32xf32, #tpu.memory_space<vmem>>, vector<64x32xf32>
      %cst_22 = arith.constant dense<0.000000e+00> : vector<1x32xf32>
      %24 = tpu.matmul %22, %23, %cst_22 {dimension_numbers = #tpu.dot_dimension_numbers<[1], [0], [0], [1], [0, 0, 1, 1], [], []>} : vector<1x64xf32>, vector<64x32xf32>, vector<1x32xf32> -> vector<1x32xf32>
      %cst_23 = arith.constant 0.001953125 : f32
      %25 = vector.broadcast %cst_23 : f32 to vector<1x32xf32>
      %26 = arith.mulf %21, %25 : vector<1x32xf32>
      %cst_24 = arith.constant 0.001953125 : f32
      %27 = vector.broadcast %cst_24 : f32 to vector<1x32xf32>
      %28 = arith.mulf %24, %27 : vector<1x32xf32>
      %29 = arith.mulf %26, %26 : vector<1x32xf32>
      %30 = arith.subf %28, %29 : vector<1x32xf32>
      %cst_25 = arith.constant 0.000000e+00 : f32
      %31 = vector.broadcast %cst_25 : f32 to vector<1x32xf32>
      %32 = arith.maximumf %30, %31 : vector<1x32xf32>
      %cst_26 = arith.constant 9.99999974E-6 : f32
      %33 = vector.broadcast %cst_26 : f32 to vector<1x32xf32>
      %34 = arith.addf %32, %33 : vector<1x32xf32>
      %35 = math.rsqrt %34 : vector<1x32xf32>
      %c0_27 = arith.constant 0 : index
      %c0_28 = arith.constant 0 : index
      %36 = vector.load %arg5[%c0_27, %c0_28] : memref<64x32xf32, #tpu.memory_space<vmem>>, vector<64x32xf32>
      %cst_29 = arith.constant dense<0.000000e+00> : vector<1x64xf32>
      %37 = tpu.matmul %26, %36, %cst_29 {dimension_numbers = #tpu.dot_dimension_numbers<[1], [1], [0], [0], [0, 0, 1, 0], [], []>} : vector<1x32xf32>, vector<64x32xf32>, vector<1x64xf32> -> vector<1x64xf32>
      %c0_30 = arith.constant 0 : index
      %c0_31 = arith.constant 0 : index
      %38 = vector.load %arg5[%c0_30, %c0_31] : memref<64x32xf32, #tpu.memory_space<vmem>>, vector<64x32xf32>
      %cst_32 = arith.constant dense<0.000000e+00> : vector<1x64xf32>
      %39 = tpu.matmul %35, %38, %cst_32 {dimension_numbers = #tpu.dot_dimension_numbers<[1], [1], [0], [0], [0, 0, 1, 0], [], []>} : vector<1x32xf32>, vector<64x32xf32>, vector<1x64xf32> -> vector<1x64xf32>
      %c0_33 = arith.constant 0 : index
      %c0_34 = arith.constant 0 : index
      %40 = vector.load %arg3[%c0_33, %c0_34] : memref<1x64xf32, #tpu.memory_space<vmem>>, vector<1x64xf32>
      %41 = arith.mulf %40, %39 : vector<1x64xf32>
      %c0_35 = arith.constant 0 : index
      %c0_36 = arith.constant 0 : index
      %c0_37 = arith.constant 0 : index
      %42 = vector.load %arg6[%c0_35, %c0_36, %c0_37] : memref<1x1x64xf32, #tpu.memory_space<vmem>>, vector<1x1x64xf32>
      %43 = vector.shape_cast %42 : vector<1x1x64xf32> to vector<1x64xf32>
      %44 = vector.shape_cast %41 : vector<1x64xf32> to vector<1x1x64xf32>
      tpu.vector_store %arg6[%c0_35, %c0_36, %c0_37], %44 {strides = array<i32>} : memref<1x1x64xf32, #tpu.memory_space<vmem>>, vector<1x1x64xf32>,
      %c0_38 = arith.constant 0 : index
      %c0_39 = arith.constant 0 : index
      %45 = vector.load %arg4[%c0_38, %c0_39] : memref<1x64xf32, #tpu.memory_space<vmem>>, vector<1x64xf32>
      %46 = arith.mulf %41, %37 : vector<1x64xf32>
      %47 = arith.subf %45, %46 : vector<1x64xf32>
      %c0_40 = arith.constant 0 : index
      %c0_41 = arith.constant 0 : index
      %c0_42 = arith.constant 0 : index
      %48 = vector.load %arg7[%c0_40, %c0_41, %c0_42] : memref<1x1x64xf32, #tpu.memory_space<vmem>>, vector<1x1x64xf32>
      %49 = vector.shape_cast %48 : vector<1x1x64xf32> to vector<1x64xf32>
      %50 = vector.shape_cast %47 : vector<1x64xf32> to vector<1x1x64xf32>
      tpu.vector_store %arg7[%c0_40, %c0_41, %c0_42], %50 {strides = array<i32>} : memref<1x1x64xf32, #tpu.memory_space<vmem>>, vector<1x1x64xf32>,
    } else {
    }
    return
  }
  func.func @transform_0(%arg0: i32, %arg1: i32) -> (i32, i32, i32) {
    %c0_i32 = arith.constant 0 : i32
    %c0_i32_0 = arith.constant 0 : i32
    return %arg0, %arg1, %c0_i32 : i32, i32, i32
  }
  func.func @transform_1(%arg0: i32, %arg1: i32) -> (i32, i32) {
    %c0_i32 = arith.constant 0 : i32
    %c0_i32_0 = arith.constant 0 : i32
    %c0_i32_1 = arith.constant 0 : i32
    return %c0_i32, %c0_i32_0 : i32, i32
  }
  func.func @transform_2(%arg0: i32, %arg1: i32) -> (i32, i32) {
    %c0_i32 = arith.constant 0 : i32
    %c0_i32_0 = arith.constant 0 : i32
    %c0_i32_1 = arith.constant 0 : i32
    return %c0_i32, %c0_i32_0 : i32, i32
  }
  func.func @transform_3(%arg0: i32, %arg1: i32) -> (i32, i32) {
    %c0_i32 = arith.constant 0 : i32
    %c0_i32_0 = arith.constant 0 : i32
    %c0_i32_1 = arith.constant 0 : i32
    return %c0_i32, %c0_i32_0 : i32, i32
  }
  func.func @transform_4(%arg0: i32, %arg1: i32) -> (i32, i32, i32) {
    %c0_i32 = arith.constant 0 : i32
    %c0_i32_0 = arith.constant 0 : i32
    %c0_i32_1 = arith.constant 0 : i32
    return %arg0, %c0_i32, %c0_i32_0 : i32, i32, i32
  }
  func.func @transform_5(%arg0: i32, %arg1: i32) -> (i32, i32, i32) {
    %c0_i32 = arith.constant 0 : i32
    %c0_i32_0 = arith.constant 0 : i32
    %c0_i32_1 = arith.constant 0 : i32
    return %arg0, %c0_i32, %c0_i32_0 : i32, i32, i32
  }
}

</mosaic_0001>

<llo_original>
// kernel: tpu_custom_call.1
$region0: #{tpu_custom_call.1}
  #allocation0 [shape = 'u32[]', space=smem, size = 0x4, offset = 0x4, fixed_abs, tag = 'smem constant byte address 0x4 - core index']
  #allocation1 [shape = 'u32[72,128]{1,0:T(1,128)}', space=vmem, size = 0x9000, scoped, tag = 'internal scratch']
  #allocation2 [shape = 'f32[1,64]{1,0:T(1,128)}', space=vmem, size = 0x200, scoped, tag = 'scratch operand']
  #allocation3 [shape = 'f32[1,64]{1,0:T(1,128)}', space=vmem, size = 0x200, scoped, tag = 'scratch operand']
  %s0 = inlined_call_operand.vmem [shape: f32[2,256,64], index: 0, kind: input, shape index: {}]
  %s1 = inlined_call_operand.vmem [shape: f32[1,64], index: 1, kind: input, shape index: {}]
  %s2 = inlined_call_operand.vmem [shape: f32[1,64], index: 2, kind: input, shape index: {}]
  %s3 = inlined_call_operand.vmem [shape: f32[64,32], index: 3, kind: input, shape index: {}]
  %s4 = inlined_call_operand.hbm [shape: f32[2,1,64], index: 4, kind: output, shape index: {0}]
  %s5 = inlined_call_operand.hbm [shape: f32[2,1,64], index: 5, kind: output, shape index: {1}]
  %6 = xla_tuple %s4, %s5
  %s7 = sld [smem:[#allocation0]]
  $region65: #{tpu_custom_call.1} parent=0
    _
  %s9 = ssub.s32 1, %s7
  %s10 = scalar_select 0, %s9, %s7
  $region1: #{tpu_custom_call.1} parent=0
    #allocation4 [shape = 'u8[1024]{0}', space=vmem, size = 0x400, scoped, tag = 'output window, operand 0']
    #allocation5 [shape = 's32[2]{0}', space=sflag, size = 0x8, scoped, tag = 'scoped memory for tpu_custom_call.1']
    #allocation6 [shape = 'u8[1024]{0}', space=vmem, size = 0x400, scoped, tag = 'output window, operand 1']
    #allocation7 [shape = 's32[2]{0}', space=sflag, size = 0x8, scoped, tag = 'scoped memory for tpu_custom_call.1']
    %11 = vsyncpa [#allocation5], 0
    %s12 = scalar_lea.sflag [#allocation5], 1
    %13 = vsyncpa %s12, 0
    %14 = vsyncpa [#allocation7], 0
    %s15 = scalar_lea.sflag [#allocation7], 1
    %16 = vsyncpa %s15, 0
    loop: start=0, step=1, limit=6
    $region2: #{tpu_custom_call.1} parent=1 // loop_pre_header
      _
    $region3: #{tpu_custom_call.1} parent=1 // loop_header
      %s18 = sphi 0, %s22
      %p19 = scmp.ge.s32.totalorder %s18, 6
      %s25 = sphi 0, %s37
      %s26 = sphi 0, %s33
      %s27 = sphi 0, %s25
      %s28 = sphi 0, %s26
      %s29 = sphi 0, %s27
      %s30 = sphi 0, %s28
      %s42 = sphi 0, %s44
      %s45 = sphi 0, %s42
      %s46 = sphi 0, %s45
      %s62 = sphi 0, %s46
      %s66 = sphi 0, %s66
      %s68 = sphi 0, %s66
      %s69 = sphi 0, %s68
      %s83 = sphi 0, %s69
      %s87 = sphi 0, %s87
      %s89 = sphi 0, %s87
      %s90 = sphi 0, %s89
      %s104 = sphi 0, %s90
      %s108 = sphi 0, %s108
      %s110 = sphi 0, %s108
      %s111 = sphi 0, %s110
      %s125 = sphi 0, %s111
      %s131 = sphi 0, %s133
      %s134 = sphi 0, %s131
      %s135 = sphi 0, %s134
      %s151 = sphi 0, %s135
      %s157 = sphi 0, %s159
      %s160 = sphi 0, %s157
      %s161 = sphi 0, %s160
      %s177 = sphi 0, %s161
    $region4: #{tpu_custom_call.1} parent=1 // loop_header_branch
      %21 = sbr.rel (%p19) target = $region8
    $region5: #{tpu_custom_call.1} parent=1 // loop_body
      %s23 = ssub.s32 %s18, 1
      %s24 = ssub.s32 %s18, 2
      %s31 = sadd.s32 1, %s26
      %p32 = scmp.ge.s32.totalorder %s31, 2
      %s33 = scalar_select %p32, 0, %s31
      %s34 = sadd.s32 1, %s25
      %s35 = scalar_select %p32, %s34, %s25
      %p36 = scmp.ge.s32.totalorder %s35, 2
      %s37 = scalar_select %p36, 0, %s35
      %s38 = ssub.s32 %s25, %s37
      %s39 = ssub.s32 %s26, %s33
      %s40 = sor.u32 %s38, %s39
      %p41 = scmp.eq.s32.totalorder %s40, 0
      %s43 = sadd.s32 %s42, 1
      %s44 = scalar_select %p41, %s42, %s43
      %p47 = pneg %p41
      %p48 = scmp.eq.s32.totalorder %s18, 3
      %p49 = por %p47, %p48
      %p50 = scmp.ne.s32.totalorder %s42, %s45
      %p51 = scmp.eq.s32.totalorder %s18, 0
      %p52 = por %p50, %p51
      %p53 = scmp.ne.s32.totalorder %s42, %s45
      %p54 = scmp.eq.s32.totalorder %s23, 3
      %p55 = por %p53, %p54
      %p56 = scmp.ne.s32.totalorder %s45, %s46
      %p57 = scmp.eq.s32.totalorder %s23, 0
      %p58 = por %p56, %p57
      %p59 = scmp.ne.s32.totalorder %s45, %s46
      %p60 = scmp.eq.s32.totalorder %s24, 3
      %p61 = por %p59, %p60
      %p63 = scmp.ne.s32.totalorder %s46, %s62
      %p64 = scmp.eq.s32.totalorder %s24, 0
      %p65 = por %p63, %p64
      %s67 = sadd.s32 %s66, 1
      %p70 = scmp.eq.s32.totalorder %s18, 3
      %p71 = scmp.ne.s32.totalorder %s66, %s68
      %p72 = scmp.eq.s32.totalorder %s18, 0
      %p73 = por %p71, %p72
      %p74 = scmp.ne.s32.totalorder %s66, %s68
      %p75 = scmp.eq.s32.totalorder %s23, 3
      %p76 = por %p74, %p75
      %p77 = scmp.ne.s32.totalorder %s68, %s69
      %p78 = scmp.eq.s32.totalorder %s23, 0
      %p79 = por %p77, %p78
      %p80 = scmp.ne.s32.totalorder %s68, %s69
      %p81 = scmp.eq.s32.totalorder %s24, 3
      %p82 = por %p80, %p81
      %p84 = scmp.ne.s32.totalorder %s69, %s83
      %p85 = scmp.eq.s32.totalorder %s24, 0
      %p86 = por %p84, %p85
      %s88 = sadd.s32 %s87, 1
      %p91 = scmp.eq.s32.totalorder %s18, 3
      %p92 = scmp.ne.s32.totalorder %s87, %s89
      %p93 = scmp.eq.s32.totalorder %s18, 0
      %p94 = por %p92, %p93
      %p95 = scmp.ne.s32.totalorder %s87, %s89
      %p96 = scmp.eq.s32.totalorder %s23, 3
      %p97 = por %p95, %p96
      %p98 = scmp.ne.s32.totalorder %s89, %s90
      %p99 = scmp.eq.s32.totalorder %s23, 0
      %p100 = por %p98, %p99
      %p101 = scmp.ne.s32.totalorder %s89, %s90
      %p102 = scmp.eq.s32.totalorder %s24, 3
      %p103 = por %p101, %p102
      %p105 = scmp.ne.s32.totalorder %s90, %s104
      %p106 = scmp.eq.s32.totalorder %s24, 0
      %p107 = por %p105, %p106
      %s109 = sadd.s32 %s108, 1
      %p112 = scmp.eq.s32.totalorder %s18, 3
      %p113 = scmp.ne.s32.totalorder %s108, %s110
      %p114 = scmp.eq.s32.totalorder %s18, 0
      %p115 = por %p113, %p114
      %p116 = scmp.ne.s32.totalorder %s108, %s110
      %p117 = scmp.eq.s32.totalorder %s23, 3
      %p118 = por %p116, %p117
      %p119 = scmp.ne.s32.totalorder %s110, %s111
      %p120 = scmp.eq.s32.totalorder %s23, 0
      %p121 = por %p119, %p120
      %p122 = scmp.ne.s32.totalorder %s110, %s111
      %p123 = scmp.eq.s32.totalorder %s24, 3
      %p124 = por %p122, %p123
      %p126 = scmp.ne.s32.totalorder %s111, %s125
      %p127 = scmp.eq.s32.totalorder %s24, 0
      %p128 = por %p126, %p127
      %s129 = ssub.s32 %s25, %s37
      %p130 = scmp.eq.s32.totalorder %s129, 0
      %s132 = sadd.s32 %s131, 1
      %s133 = scalar_select %p130, %s131, %s132
      %p136 = pneg %p130
      %p137 = scmp.eq.s32.totalorder %s18, 3
      %p138 = por %p136, %p137
      %p139 = scmp.ne.s32.totalorder %s131, %s134
      %p140 = scmp.eq.s32.totalorder %s18, 0
      %p141 = por %p139, %p140
      %p142 = scmp.ne.s32.totalorder %s131, %s134
      %p143 = scmp.eq.s32.totalorder %s23, 3
      %p144 = por %p142, %p143
      %p145 = scmp.ne.s32.totalorder %s134, %s135
      %p146 = scmp.eq.s32.totalorder %s23, 0
      %p147 = por %p145, %p146
      %p148 = scmp.ne.s32.totalorder %s134, %s135
      %p149 = scmp.eq.s32.totalorder %s24, 3
      %p150 = por %p148, %p149
      %p152 = scmp.ne.s32.totalorder %s135, %s151
      %p153 = scmp.eq.s32.totalorder %s24, 0
      %p154 = por %p152, %p153
      %s155 = ssub.s32 %s25, %s37
      %p156 = scmp.eq.s32.totalorder %s155, 0
      %s158 = sadd.s32 %s157, 1
      %s159 = scalar_select %p156, %s157, %s158
      %p162 = pneg %p156
      %p163 = scmp.eq.s32.totalorder %s18, 3
      %p164 = por %p162, %p163
      %p165 = scmp.ne.s32.totalorder %s157, %s160
      %p166 = scmp.eq.s32.totalorder %s18, 0
      %p167 = por %p165, %p166
      %p168 = scmp.ne.s32.totalorder %s157, %s160
      %p169 = scmp.eq.s32.totalorder %s23, 3
      %p170 = por %p168, %p169
      %p171 = scmp.ne.s32.totalorder %s160, %s161
      %p172 = scmp.eq.s32.totalorder %s23, 0
      %p173 = por %p171, %p172
      %p174 = scmp.ne.s32.totalorder %s160, %s161
      %p175 = scmp.eq.s32.totalorder %s24, 3
      %p176 = por %p174, %p175
      %p178 = scmp.ne.s32.totalorder %s161, %s177
      %p179 = scmp.eq.s32.totalorder %s24, 0
      %p180 = por %p178, %p179
      %p181 = scmp.le.s32.totalorder 1, %s18
      %p182 = scmp.lt.s32.totalorder %s18, 5
      %p183 = pnand %p181, %p182
      %p184 = pneg %p183
      // Predicated region
      $region9: #{tpu_custom_call.1} parent=5 // pred_check
        _
      $region10: #{tpu_custom_call.1} parent=5 // pred_check_branch
        %186 = sbr.rel (%p183) target = $region12
      $region11: #{tpu_custom_call.1} parent=5 // pred_region
        %s187 = ssub.s32 %s18, 1
        // Predicated region
        $region13: #{tpu_custom_call.1} parent=11 // pred_check
          %p188 = pneg %p79
        $region14: #{tpu_custom_call.1} parent=11 // pred_check_branch
          %190 = sbr.rel (%p188) target = $region16
        $region15: #{tpu_custom_call.1} parent=11 // pred_region
          _
        $region16: #{tpu_custom_call.1} parent=11 // pred_fallthru
          _
        // Predicated region
        $region17: #{tpu_custom_call.1} parent=11 // pred_check
          %p191 = pneg %p100
        $region18: #{tpu_custom_call.1} parent=11 // pred_check_branch
          %193 = sbr.rel (%p191) target = $region20
        $region19: #{tpu_custom_call.1} parent=11 // pred_region
          _
        $region20: #{tpu_custom_call.1} parent=11 // pred_fallthru
          _
        // Predicated region
        $region21: #{tpu_custom_call.1} parent=11 // pred_check
          %p194 = pneg %p121
        $region22: #{tpu_custom_call.1} parent=11 // pred_check_branch
          %196 = sbr.rel (%p194) target = $region24
        $region23: #{tpu_custom_call.1} parent=11 // pred_region
          _
        $region24: #{tpu_custom_call.1} parent=11 // pred_fallthru
          _
      $region12: #{tpu_custom_call.1} parent=5 // pred_fallthru
        _
      %p197 = scmp.lt.s32.totalorder %s18, 4
      // Predicated region
      $region25: #{tpu_custom_call.1} parent=5 // pred_check
        %p198 = pneg %p197
      $region26: #{tpu_custom_call.1} parent=5 // pred_check_branch
        %200 = sbr.rel (%p198) target = $region28
      $region27: #{tpu_custom_call.1} parent=5 // pred_region
        // Predicated region
        $region29: #{tpu_custom_call.1} parent=27 // pred_check
          %p201 = pneg %p52
        $region30: #{tpu_custom_call.1} parent=27 // pred_check_branch
          %203 = sbr.rel (%p201) target = $region32
        $region31: #{tpu_custom_call.1} parent=27 // pred_region
          %s204 = smul.u32 16, %s26
          %p205 = scmp.lt.s32.totalorder %s25, 1
          %s206 = scalar_select %p205, %s25, 1
          %p207 = scmp.lt.s32.totalorder %s204, 31
          %s208 = scalar_select %p207, %s204, 31
          %s209 = smul.addr %s206, 32
          %s210 = sadd.s32 %s208, %s209
          %s211 = smul.addr %s210, 8
          %s212 = scalar_lea.vmem %s0, %s211
          %s213 = smul.u32 16, %s26
        $region32: #{tpu_custom_call.1} parent=27 // pred_fallthru
          _
      $region28: #{tpu_custom_call.1} parent=5 // pred_fallthru
        _
      %p214 = scmp.le.s32.totalorder 1, %s18
      %p215 = scmp.lt.s32.totalorder %s18, 5
      %p216 = pnand %p214, %p215
      %p217 = pneg %p216
      // Predicated region
      $region33: #{tpu_custom_call.1} parent=5 // pred_check
        _
      $region34: #{tpu_custom_call.1} parent=5 // pred_check_branch
        %219 = sbr.rel (%p216) target = $region36
      $region35: #{tpu_custom_call.1} parent=5 // pred_region
        %s220 = ssub.s32 %s18, 1
        %s221 = smul.u32 16, %s28
        %p222 = scmp.lt.s32.totalorder %s27, 1
        %s223 = scalar_select %p222, %s27, 1
        %p224 = scmp.lt.s32.totalorder %s221, 31
        %s225 = scalar_select %p224, %s221, 31
        %s226 = smul.addr %s223, 32
        %s227 = sadd.s32 %s225, %s226
        %s228 = smul.addr %s227, 8
        %s229 = scalar_lea.vmem %s0, %s228
        %p230 = pneg %p58
        %p231 = pneg %p55
        %p232 = pneg %p79
        %p233 = pneg %p76
        %p234 = pneg %p100
        %p235 = pneg %p97
        %p236 = pneg %p121
        %p237 = pneg %p118
        %p238 = pneg %p147
        %p239 = pneg %p144
        %s240 = sand.u32 %s134, 1
        %s241 = scalar_lea.sflag [#allocation5], %s240
        %s242 = sand.u32 %s134, 1
        %s243 = scalar_lea.vmem [#allocation4], %s242
        %p244 = pneg %p173
        %p245 = pneg %p170
        %s246 = sand.u32 %s160, 1
        %s247 = scalar_lea.sflag [#allocation7], %s246
        %s248 = sand.u32 %s160, 1
        %s249 = scalar_lea.vmem [#allocation6], %s248
        %s250 = smul.u32 16, %s28
        %p251 = scmp.lt.s32.totalorder %s27, 1
        %s252 = scalar_select %p251, %s27, 1
        %p253 = scmp.lt.s32.totalorder %s250, 31
        %s254 = scalar_select %p253, %s250, 31
        %s255 = smul.addr %s252, 32
        %s256 = sadd.s32 %s254, %s255
        %s257 = smul.addr %s256, 8
        %s258 = scalar_lea.vmem %s0, %s257
        %s259 = smul.u32 16, %s28
        %p260 = scmp.eq.s32.totalorder %s28, 0
        // Predicated region
        $region37: #{tpu_custom_call.1} parent=35 // pred_check
          %p261 = pneg %p260
        $region38: #{tpu_custom_call.1} parent=35 // pred_check_branch
          %263 = sbr.rel (%p261) target = $region40
        $region39: #{tpu_custom_call.1} parent=35 // pred_region
          %vm264 = vcmask 516096
          %265 = vst.msk [vmem:[#allocation2] sm:$0x1] %vm264, 0.0
          %266 = vst.msk [vmem:[#allocation3] sm:$0x1] %vm264, 0.0
        $region40: #{tpu_custom_call.1} parent=35 // pred_fallthru
          _
        %v267 = vld [vmem:[%s258] sm:$0xff]
        %v268 = vld [vmem:[%s258 + $0x8] sm:$0xff]
        %v269 = vld [vmem:[%s258 + $0x10] sm:$0xff]
        %v270 = vld [vmem:[%s258 + $0x18] sm:$0xff]
        %v271 = vld [vmem:[%s258 + $0x20] sm:$0xff]
        %v272 = vld [vmem:[%s258 + $0x28] sm:$0xff]
        %v273 = vld [vmem:[%s258 + $0x30] sm:$0xff]
        %v274 = vld [vmem:[%s258 + $0x38] sm:$0xff]
        %v275 = vld [vmem:[%s258 + $0x40] sm:$0xff]
        %v276 = vld [vmem:[%s258 + $0x48] sm:$0xff]
        %v277 = vld [vmem:[%s258 + $0x50] sm:$0xff]
        %v278 = vld [vmem:[%s258 + $0x58] sm:$0xff]
        %v279 = vld [vmem:[%s258 + $0x60] sm:$0xff]
        %v280 = vld [vmem:[%s258 + $0x68] sm:$0xff]
        %v281 = vld [vmem:[%s258 + $0x70] sm:$0xff]
        %v282 = vld [vmem:[%s258 + $0x78] sm:$0xff]
        %v283 = vld [vmem:[#allocation2] sm:$0x1]
        %vm284 = vcmask 523264
        %v285 = vsel %vm284, %v267, 0.0
        %v286 = vsel %vm284, %v268, 0.0
        %v287 = vadd.f32 %v285, %v286
        %v288 = vsel %vm284, %v269, 0.0
        %v289 = vadd.f32 %v287, %v288
        %v290 = vsel %vm284, %v270, 0.0
        %v291 = vadd.f32 %v289, %v290
        %v292 = vsel %vm284, %v271, 0.0
        %v293 = vadd.f32 %v291, %v292
        %v294 = vsel %vm284, %v272, 0.0
        %v295 = vadd.f32 %v293, %v294
        %v296 = vsel %vm284, %v273, 0.0
        %v297 = vadd.f32 %v295, %v296
        %v298 = vsel %vm284, %v274, 0.0
        %v299 = vadd.f32 %v297, %v298
        %v300 = vsel %vm284, %v275, 0.0
        %v301 = vadd.f32 %v299, %v300
        %v302 = vsel %vm284, %v276, 0.0
        %v303 = vadd.f32 %v301, %v302
        %v304 = vsel %vm284, %v277, 0.0
        %v305 = vadd.f32 %v303, %v304
        %v306 = vsel %vm284, %v278, 0.0
        %v307 = vadd.f32 %v305, %v306
        %v308 = vsel %vm284, %v279, 0.0
        %v309 = vadd.f32 %v307, %v308
        %v310 = vsel %vm284, %v280, 0.0
        %v311 = vadd.f32 %v309, %v310
        %v312 = vsel %vm284, %v281, 0.0
        %v313 = vadd.f32 %v311, %v312
        %v314 = vsel %vm284, %v282, 0.0
        %v315 = vadd.f32 %v313, %v314
        %v316 = vrot.slane %v315, 4
        %v317 = vadd.f32 %v315, %v316
        %v318 = vrot.slane %v317, 2
        %v319 = vadd.f32 %v317, %v318
        %v320 = vrot.slane %v319, 1
        %v321 = vadd.f32 %v319, %v320
        %v322 = vadd.f32 %v283, %v321
        %vm323 = vcmask 516096
        %324 = vst.msk [vmem:[#allocation2] sm:$0x1] %vm323, %v322
        %v325 = vld [vmem:[#allocation3] sm:$0x1]
        %v326 = vmul.f32 %v267, %v267
        %v327 = vmul.f32 %v268, %v268
        %v328 = vmul.f32 %v269, %v269
        %v329 = vmul.f32 %v270, %v270
        %v330 = vmul.f32 %v271, %v271
        %v331 = vmul.f32 %v272, %v272
        %v332 = vmul.f32 %v273, %v273
        %v333 = vmul.f32 %v274, %v274
        %v334 = vmul.f32 %v275, %v275
        %v335 = vmul.f32 %v276, %v276
        %v336 = vmul.f32 %v277, %v277
        %v337 = vmul.f32 %v278, %v278
        %v338 = vmul.f32 %v279, %v279
        %v339 = vmul.f32 %v280, %v280
        %v340 = vmul.f32 %v281, %v281
        %v341 = vmul.f32 %v282, %v282
        %v342 = vsel %vm284, %v326, 0.0
        %v343 = vsel %vm284, %v327, 0.0
        %v344 = vadd.f32 %v342, %v343
        %v345 = vsel %vm284, %v328, 0.0
        %v346 = vadd.f32 %v344, %v345
        %v347 = vsel %vm284, %v329, 0.0
        %v348 = vadd.f32 %v346, %v347
        %v349 = vsel %vm284, %v330, 0.0
        %v350 = vadd.f32 %v348, %v349
        %v351 = vsel %vm284, %v331, 0.0
        %v352 = vadd.f32 %v350, %v351
        %v353 = vsel %vm284, %v332, 0.0
        %v354 = vadd.f32 %v352, %v353
        %v355 = vsel %vm284, %v333, 0.0
        %v356 = vadd.f32 %v354, %v355
        %v357 = vsel %vm284, %v334, 0.0
        %v358 = vadd.f32 %v356, %v357
        %v359 = vsel %vm284, %v335, 0.0
        %v360 = vadd.f32 %v358, %v359
        %v361 = vsel %vm284, %v336, 0.0
        %v362 = vadd.f32 %v360, %v361
        %v363 = vsel %vm284, %v337, 0.0
        %v364 = vadd.f32 %v362, %v363
        %v365 = vsel %vm284, %v338, 0.0
        %v366 = vadd.f32 %v364, %v365
        %v367 = vsel %vm284, %v339, 0.0
        %v368 = vadd.f32 %v366, %v367
        %v369 = vsel %vm284, %v340, 0.0
        %v370 = vadd.f32 %v368, %v369
        %v371 = vsel %vm284, %v341, 0.0
        %v372 = vadd.f32 %v370, %v371
        %v373 = vrot.slane %v372, 4
        %v374 = vadd.f32 %v372, %v373
        %v375 = vrot.slane %v374, 2
        %v376 = vadd.f32 %v374, %v375
        %v377 = vrot.slane %v376, 1
        %v378 = vadd.f32 %v376, %v377
        %v379 = vadd.f32 %v325, %v378
        %380 = vst.msk [vmem:[#allocation3] sm:$0x1] %vm323, %v379
        %p381 = scmp.eq.s32.totalorder %s28, 1
        // Predicated region
        $region41: #{tpu_custom_call.1} parent=35 // pred_check
          %p382 = pneg %p381
        $region42: #{tpu_custom_call.1} parent=35 // pred_check_branch
          %384 = sbr.rel (%p382) target = $region44
        $region43: #{tpu_custom_call.1} parent=35 // pred_region
          %v385 = vld [vmem:[#allocation2] sm:$0x1]
          %v386 = vld [vmem:[%s3] sm:$0xff]
          %v387 = vld [vmem:[%s3 + $0x8] sm:$0xff]
          %v388 = vld [vmem:[%s3 + $0x10] sm:$0xff]
          %v389 = vld [vmem:[%s3 + $0x18] sm:$0xff]
          %v390 = vld [vmem:[%s3 + $0x20] sm:$0xff]
          %v391 = vld [vmem:[%s3 + $0x28] sm:$0xff]
          %v392 = vld [vmem:[%s3 + $0x30] sm:$0xff]
          %v393 = vld [vmem:[%s3 + $0x38] sm:$0xff]
          %v395 = vsel %vm284, %v385, 0
          %397 = vmatpush.msra.mxu0 0.0
          %398 = vmatpush.msra.mxu0 0.0
          %399 = vmatpush.msra.mxu0 0.0
          %400 = vmatpush.msra.mxu0 0.0
          %401 = vmatpush.msra.mxu0 0.0
          %402 = vmatpush.msra.mxu0 0.0
          %403 = vmatpush.msra.mxu0 0.0
          %404 = vmatpush.msra.mxu0 0.0
          %405 = vmatpush.msra.mxu0 %v393
          %406 = vmatpush.msra.mxu0 %v392
          %407 = vmatpush.msra.mxu0 %v391
          %408 = vmatpush.msra.mxu0 %v390
          %409 = vmatpush.msra.mxu0 %v389
          %410 = vmatpush.msra.mxu0 %v388
          %411 = vmatpush.msra.mxu0 %v387
          %412 = vmatpush.msra.mxu0 %v386
          %413 = vmatmul.f32.gmra.mxu0 %v395
          %v414 = vpop.f32.mrf.mxu0
          %v415 = vadd.f32 0.0, %v414
          %416 = vdwg.mxu0
          %v417 = vld [vmem:[#allocation3] sm:$0x1]
          %v419 = vsel %vm284, %v417, 0
          %421 = vmatpush.msra.mxu0 0.0
          %422 = vmatpush.msra.mxu0 0.0
          %423 = vmatpush.msra.mxu0 0.0
          %424 = vmatpush.msra.mxu0 0.0
          %425 = vmatpush.msra.mxu0 0.0
          %426 = vmatpush.msra.mxu0 0.0
          %427 = vmatpush.msra.mxu0 0.0
          %428 = vmatpush.msra.mxu0 0.0
          %429 = vmatpush.msra.mxu0 %v393
          %430 = vmatpush.msra.mxu0 %v392
          %431 = vmatpush.msra.mxu0 %v391
          %432 = vmatpush.msra.mxu0 %v390
          %433 = vmatpush.msra.mxu0 %v389
          %434 = vmatpush.msra.mxu0 %v388
          %435 = vmatpush.msra.mxu0 %v387
          %436 = vmatpush.msra.mxu0 %v386
          %437 = vmatmul.f32.gmra.mxu0 %v419
          %v438 = vpop.f32.mrf.mxu0
          %v439 = vadd.f32 0.0, %v438
          %440 = vdwg.mxu0
          %v441 = vmul.f32 %v415, 0.001953125
          %v442 = vmul.f32 %v439, 0.001953125
          %v443 = vmul.f32 %v441, %v441
          %v444 = vsub.f32 %v442, %v443
          %v445 = vmax.f32 %v444, 0.0
          %v446 = vadd.f32 %v445, 1e-05
          %v447 = vrsqrt.pop %v446
          %v448 = vmul.f32 %v447, %v446
          %v449 = vmul.f32 %v448, %v447
          %v450 = vmul.f32 0.5, %v449
          %v451 = vsub.f32 1.5, %v450
          %v452 = vmul.f32 %v447, %v451
          %vm453 = vweird.f32 %v446
          %vm454 = vweird.f32 %v447
          %vm455 = vmor %vm453, %vm454
          %v456 = vsel %vm455, %v447, %v452
          %vm457 = vcmask 261120
          %v459 = vsel %vm457, %v441, 0
          %v462 = vsel %vm457, %v386, 0
          %v465 = vsel %vm457, %v387, 0
          %v468 = vsel %vm457, %v388, 0
          %v471 = vsel %vm457, %v389, 0
          %v474 = vsel %vm457, %v390, 0
          %v477 = vsel %vm457, %v391, 0
          %v480 = vsel %vm457, %v392, 0
          %v483 = vsel %vm457, %v393, 0
          %485 = vmatpush.xpose.msra.mxu0 0.0
          %486 = vmatpush.xpose.msra.mxu0 0.0
          %487 = vmatpush.xpose.msra.mxu0 0.0
          %488 = vmatpush.xpose.msra.mxu0 0.0
          %489 = vmatpush.xpose.msra.mxu0 0.0
          %490 = vmatpush.xpose.msra.mxu0 0.0
          %491 = vmatpush.xpose.msra.mxu0 0.0
          %492 = vmatpush.xpose.msra.mxu0 0.0
          %493 = vmatpush.xpose.msra.mxu0 %v483
          %494 = vmatpush.xpose.msra.mxu0 %v480
          %495 = vmatpush.xpose.msra.mxu0 %v477
          %496 = vmatpush.xpose.msra.mxu0 %v474
          %497 = vmatpush.xpose.msra.mxu0 %v471
          %498 = vmatpush.xpose.msra.mxu0 %v468
          %499 = vmatpush.xpose.msra.mxu0 %v465
          %500 = vmatpush.xpose.msra.mxu0 %v462
          %501 = vmatmul.f32.gmra.mxu0 %v459
          %v502 = vpop.f32.mrf.mxu0
          %v503 = vadd.f32 0.0, %v502
          %504 = vdwg.mxu0
          %v506 = vsel %vm457, %v456, 0
          %508 = vmatpush.xpose.msra.mxu0 0.0
          %509 = vmatpush.xpose.msra.mxu0 0.0
          %510 = vmatpush.xpose.msra.mxu0 0.0
          %511 = vmatpush.xpose.msra.mxu0 0.0
          %512 = vmatpush.xpose.msra.mxu0 0.0
          %513 = vmatpush.xpose.msra.mxu0 0.0
          %514 = vmatpush.xpose.msra.mxu0 0.0
          %515 = vmatpush.xpose.msra.mxu0 0.0
          %516 = vmatpush.xpose.msra.mxu0 %v483
          %517 = vmatpush.xpose.msra.mxu0 %v480
          %518 = vmatpush.xpose.msra.mxu0 %v477
          %519 = vmatpush.xpose.msra.mxu0 %v474
          %520 = vmatpush.xpose.msra.mxu0 %v471
          %521 = vmatpush.xpose.msra.mxu0 %v468
          %522 = vmatpush.xpose.msra.mxu0 %v465
          %523 = vmatpush.xpose.msra.mxu0 %v462
          %524 = vmatmul.f32.gmra.mxu0 %v506
          %v525 = vpop.f32.mrf.mxu0
          %v526 = vadd.f32 0.0, %v525
          %527 = vdwg.mxu0
          %v528 = vld [vmem:[%s1] sm:$0x1]
          %v529 = vmul.f32 %v528, %v526
          %530 = vst.msk [vmem:[%s243] sm:$0x1] %vm323, %v529
          %v531 = vld [vmem:[%s2] sm:$0x1]
          %v532 = vmul.f32 %v529, %v503
          %v533 = vsub.f32 %v531, %v532
          %534 = vst.msk [vmem:[%s249] sm:$0x1] %vm323, %v533
        $region44: #{tpu_custom_call.1} parent=35 // pred_fallthru
          _
        %s535 = sand.u32 %s134, 1
        %s536 = scalar_lea.sflag [#allocation5], %s535
        %s537 = sand.u32 %s134, 1
        %s538 = scalar_lea.vmem [#allocation4], %s537
        %s539 = sand.u32 %s160, 1
        %s540 = scalar_lea.sflag [#allocation7], %s539
        %s541 = sand.u32 %s160, 1
        %s542 = scalar_lea.vmem [#allocation6], %s541
        // Predicated region
        $region45: #{tpu_custom_call.1} parent=35 // pred_check
          %p543 = pneg %p144
        $region46: #{tpu_custom_call.1} parent=35 // pred_check_branch
          %545 = sbr.rel (%p543) target = $region48
        $region47: #{tpu_custom_call.1} parent=35 // pred_region
          %547 = vsyncadd %s536, 0
          %s548 = scalar_lea.hbm %s4, %s27
          %s550 = sshll.u32 %s538, 4
          %s551 = int_to_ptr.vmem [resolvable:$true] %s550
          %s552 = sshll.u32 %s548, 4
          %s553 = int_to_ptr.hbm [resolvable:$true] %s552
          %555 = dma.vmem_to_hbm [thread:$0]  %s551, 16, %s553, %s536
        $region48: #{tpu_custom_call.1} parent=35 // pred_fallthru
          _
        // Predicated region
        $region49: #{tpu_custom_call.1} parent=35 // pred_check
          %p556 = pneg %p170
        $region50: #{tpu_custom_call.1} parent=35 // pred_check_branch
          %558 = sbr.rel (%p556) target = $region52
        $region51: #{tpu_custom_call.1} parent=35 // pred_region
          %560 = vsyncadd %s540, 0
          %s561 = scalar_lea.hbm %s5, %s27
          %s563 = sshll.u32 %s542, 4
          %s564 = int_to_ptr.vmem [resolvable:$true] %s563
          %s565 = sshll.u32 %s561, 4
          %s566 = int_to_ptr.hbm [resolvable:$true] %s565
          %568 = dma.vmem_to_hbm [thread:$0]  %s564, 16, %s566, %s540
        $region52: #{tpu_custom_call.1} parent=35 // pred_fallthru
          _
      $region36: #{tpu_custom_call.1} parent=5 // pred_fallthru
        _
      %p569 = scmp.le.s32.totalorder 2, %s18
      // Predicated region
      $region53: #{tpu_custom_call.1} parent=5 // pred_check
        %p570 = pneg %p569
      $region54: #{tpu_custom_call.1} parent=5 // pred_check_branch
        %572 = sbr.rel (%p570) target = $region56
      $region55: #{tpu_custom_call.1} parent=5 // pred_region
        %s573 = ssub.s32 %s18, 2
        // Predicated region
        $region57: #{tpu_custom_call.1} parent=55 // pred_check
          %p574 = pneg %p150
        $region58: #{tpu_custom_call.1} parent=55 // pred_check_branch
          %576 = sbr.rel (%p574) target = $region60
        $region59: #{tpu_custom_call.1} parent=55 // pred_region
          %s577 = sand.u32 %s135, 1
          %s578 = scalar_lea.sflag [#allocation5], %s577
          %s579 = sand.u32 %s135, 1
          %s580 = scalar_lea.vmem [#allocation4], %s579
          %582 = dma.done %s578, 16
        $region60: #{tpu_custom_call.1} parent=55 // pred_fallthru
          _
        // Predicated region
        $region61: #{tpu_custom_call.1} parent=55 // pred_check
          %p583 = pneg %p176
        $region62: #{tpu_custom_call.1} parent=55 // pred_check_branch
          %585 = sbr.rel (%p583) target = $region64
        $region63: #{tpu_custom_call.1} parent=55 // pred_region
          %s586 = sand.u32 %s161, 1
          %s587 = scalar_lea.sflag [#allocation7], %s586
          %s588 = sand.u32 %s161, 1
          %s589 = scalar_lea.vmem [#allocation6], %s588
          %591 = dma.done %s587, 16
        $region64: #{tpu_custom_call.1} parent=55 // pred_fallthru
          _
      $region56: #{tpu_custom_call.1} parent=5 // pred_fallthru
        _
    $region6: #{tpu_custom_call.1} parent=1 // loop_footer
      %s22 = sadd.s32 1, %s18
    $region7: #{tpu_custom_call.1} parent=1 // loop_footer_branch
      %17 = sbr.rel target = $region3
    $region8: #{tpu_custom_call.1} parent=1 // loop_exit
      _
    %592 = vsyncpa [#allocation5], 1
    %s593 = scalar_lea.sflag [#allocation5], 1
    %594 = vsyncpa %s593, 1
    %595 = vsyncpa [#allocation7], 1
    %s596 = scalar_lea.sflag [#allocation7], 1
    %597 = vsyncpa %s596, 1

</llo_original>
